<compile_context>
chip_gen: v7x
topology: tpu7x:2x2x1
jax: 0.10.0
libtpu: 0.0.40
codegen_flags: <defaults>
</compile_context>

<pallas_src>
import functools
import math
import numpy as np

import jax
import jax.numpy as jnp
from jax.experimental import pallas as pl
from jax.experimental.pallas import tpu as pltpu

# ---------------- config consistent with the module (small test sizes) ----------------
IN_CH = 3
PATCH = 2          # patch_size
T_PATCH = 2        # temporal_patch_size
EMBED = 64         # embed_dim
HEADS = 4          # num_heads
HEAD_DIM = EMBED // HEADS
MLP_RATIO = 4
NUM_BLOCKS = 2
OUT_SIZE = 48      # output_size
MERGE = 2          # spatial_merge_size
EPS = 1e-6
ROPE_THETA = 10000.0  # TODO(synk): RotaryEmbedding base theta assumed 10000 (standard default)

ROW_TILE_TARGET = 2048   # patch-embed / qkv / merger row tiles (per-row VMEM cost tiny)
ATTN_Q_TILE = 256        # q-row tile for attention (+FFN) kernel


@functools.lru_cache(maxsize=1)
def _vmem_limit_bytes():
    """Generation-aware scoped-VMEM limit: ~48 MiB on v7x, ~96 MiB on v5e/v6e."""
    try:
        cap = int(pltpu.get_tpu_info().vmem_capacity_bytes)
    except Exception:  # pragma: no cover - conservative fallback
        cap = 64 * 1024 * 1024
    return max(32 * 1024 * 1024, min((cap * 3) // 4, 96 * 1024 * 1024))


def _row_tile(m, target=ROW_TILE_TARGET):
    """Largest row tile <= target that divides m and is a multiple of 8 (or m itself).

    Note: falls back to the full extent m when no divisor exists; callers keep per-row
    VMEM cost small enough that this is safe for the sizes exercised here."""
    if m <= target:
        return m
    t = target - (target % 8)
    while t >= 8:
        if m % t == 0:
            return t
        t -= 8
    return m


def _mosaic_params(semantics):
    return pltpu.CompilerParams(dimension_semantics=semantics,
                                vmem_limit_bytes=_vmem_limit_bytes())


# ------------------------------ patch embedding ------------------------------
def _patch_embed_kernel(x_ref, w_ref, o_ref):
    # Conv3d with stride == kernel, bias=False  ->  pure GEMM
    x = x_ref[...].astype(w_ref.dtype)
    o_ref[...] = jnp.dot(x, w_ref[...], preferred_element_type=jnp.float32).astype(o_ref.dtype)


def patch_embed(x2d, w):
    m, k = x2d.shape
    n = w.shape[1]
    tm = _row_tile(m)
    return pl.pallas_call(
        _patch_embed_kernel,
        out_shape=jax.ShapeDtypeStruct((m, n), jnp.float32),
        grid=(m // tm,),
        in_specs=[pl.BlockSpec((tm, k), lambda i: (i, 0)),
                  pl.BlockSpec((k, n), lambda i: (0, 0))],
        out_specs=pl.BlockSpec((tm, n), lambda i: (i, 0)),
        compiler_params=_mosaic_params(("parallel",)),
    )(x2d, w)


# --------------------------- LN1 + QKV + 2D-RoPE kernel ---------------------------
def _qkv_rope_kernel(x_ref, g_ref, b_ref, wqkv_ref, bqkv_ref, cos_ref, sin_ref, rot_ref,
                     q_ref, k_ref, v_ref, *, scale):
    x = x_ref[0].astype(jnp.float32)                              # (tr, E)

    # ---- pre-LN (f32) ----
    mu = jnp.mean(x, axis=-1, keepdims=True)
    xc = x - mu
    var = jnp.mean(xc * xc, axis=-1, keepdims=True)
    h = xc * jax.lax.rsqrt(var + EPS) * g_ref[...] + b_ref[...]

    # ---- QKV projection (bf16 MXU, f32 accumulate) ----
    hb = h.astype(wqkv_ref.dtype)
    q = jnp.dot(hb, wqkv_ref[0], preferred_element_type=jnp.float32) + bqkv_ref[0]
    k = jnp.dot(hb, wqkv_ref[1], preferred_element_type=jnp.float32) + bqkv_ref[1]
    v = jnp.dot(hb, wqkv_ref[2], preferred_element_type=jnp.float32) + bqkv_ref[2]

    # ---- 2D RoPE: rotate_half as a constant +-1 permutation matmul (lane dense, exact) ----
    cos = cos_ref[...]
    sin = sin_ref[...]
    rot = rot_ref[...]
    q = q * cos + jnp.dot(q, rot, preferred_element_type=jnp.float32) * sin
    k = k * cos + jnp.dot(k, rot, preferred_element_type=jnp.float32) * sin

    # scale hoisted out of the attention head loop (exact: power-of-two scale)
    q_ref[0] = (q * scale).astype(q_ref.dtype)
    k_ref[0] = k.astype(k_ref.dtype)
    v_ref[0] = v.astype(v_ref.dtype)


def qkv_rope(x, blk, cos, sin, rot):
    b, s, e = x.shape
    tr = _row_tile(s)
    kern = functools.partial(_qkv_rope_kernel, scale=1.0 / math.sqrt(HEAD_DIM))
    return pl.pallas_call(
        kern,
        out_shape=(jax.ShapeDtypeStruct((b, s, e), jnp.bfloat16),) * 3,
        grid=(b, s // tr),
        in_specs=[pl.BlockSpec((1, tr, e), lambda bi, ri: (bi, ri, 0)),   # x
                  pl.BlockSpec((1, e), lambda bi, ri: (0, 0)),            # ln1 gamma
                  pl.BlockSpec((1, e), lambda bi, ri: (0, 0)),            # ln1 beta
                  pl.BlockSpec((3, e, e), lambda bi, ri: (0, 0, 0)),      # qkv weights
                  pl.BlockSpec((3, 1, e), lambda bi, ri: (0, 0, 0)),      # qkv biases
                  pl.BlockSpec((tr, e), lambda bi, ri: (ri, 0)),          # cos
                  pl.BlockSpec((tr, e), lambda bi, ri: (ri, 0)),          # sin
                  pl.BlockSpec((e, e), lambda bi, ri: (0, 0))],           # rotate_half perm
        out_specs=[pl.BlockSpec((1, tr, e), lambda bi, ri: (bi, ri, 0))] * 3,
        compiler_params=_mosaic_params(("parallel", "parallel")),
    )(x, blk['ln1_g'].reshape(1, e), blk['ln1_b'].reshape(1, e),
      blk['qkv_w'], blk['qkv_b'], cos, sin, rot)


# ---------------- fused attention + FFN kernel (q-row tiled, flash-style) ----------------
def _attn_ffn_kernel(x_ref, q_ref, k_ref, v_ref, segq_ref, segk_ref,
                     wo_ref, bo_ref, g2_ref, b2_ref, w1_ref, b1_ref, w2_ref, b2f_ref,
                     o_ref, *, heads, head_dim):
    e = heads * head_dim
    x = x_ref[0].astype(jnp.float32)                               # (tq, E) residual
    qb = q_ref[0]                                                  # (tq, E) bf16, pre-scaled
    k = k_ref[0].astype(jnp.float32)                               # (S,  E)
    v = v_ref[0].astype(jnp.float32)

    # block-diagonal mask from segment ids (no O(S^2) HBM mask tensor)
    allow = segq_ref[...] == segk_ref[...]                         # (tq, S) bool
    lane = jax.lax.broadcasted_iota(jnp.int32, (1, e), 1)

    # per-head attention with full-width operands and per-head lane masks
    # TODO(synk): lane-mask trick contracts over all 64 lanes (4x MXU redundancy);
    # only relevant on v5e's smaller MXU - revisit there if MXU becomes the binder.
    def head_body(hh, acc):
        msk = (lane // head_dim == hh).astype(jnp.float32)         # (1, E) head lane mask
        kh = (k * msk).astype(jnp.bfloat16)
        vh = (v * msk).astype(jnp.bfloat16)
        s = jax.lax.dot_general(qb, kh, (((1,), (1,)), ((), ())),
                                preferred_element_type=jnp.float32)   # (tq, S)
        s = jnp.where(allow, s, -1e30)
        s = s - jnp.max(s, axis=-1, keepdims=True)
        p = jnp.exp(s)
        p = p * pl.reciprocal(jnp.sum(p, axis=-1, keepdims=True), approx=True)
        return acc + jnp.dot(p.astype(jnp.bfloat16), vh, preferred_element_type=jnp.float32)

    acc0 = jnp.zeros((x.shape[0], e), jnp.float32)
    acc = jax.lax.fori_loop(0, heads, head_body, acc0)             # bounded live ranges

    # ---- output projection + residual ----
    r1 = x + jnp.dot(acc.astype(wo_ref.dtype), wo_ref[...],
                     preferred_element_type=jnp.float32) + bo_ref[...]

    # ---- LN2 + FF1 + GELU + FF2 + residual (fused: r1 never leaves VMEM) ----
    mu = jnp.mean(r1, axis=-1, keepdims=True)
    rc = r1 - mu
    var = jnp.mean(rc * rc, axis=-1, keepdims=True)
    h = rc * jax.lax.rsqrt(var + EPS) * g2_ref[...] + b2_ref[...]
    h1 = jnp.dot(h.astype(w1_ref.dtype), w1_ref[...],
                 preferred_element_type=jnp.float32) + b1_ref[...]
    # TODO(synk): FasterGELU assumed == tanh-approx GELU (not QuickGELU) per reference naming.
    h1 = jax.nn.gelu(h1, approximate=True)
    y = jnp.dot(h1.astype(w2_ref.dtype), w2_ref[...],
                preferred_element_type=jnp.float32) + b2f_ref[...]
    o_ref[0] = (r1 + y).astype(o_ref.dtype)


def attn_ffn(x, q, k, v, blk, seg_c, seg_r):
    b, s, e = x.shape
    hdim = blk['ff1_w'].shape[1]
    tq = _row_tile(s, ATTN_Q_TILE)
    kern = functools.partial(_attn_ffn_kernel, heads=HEADS, head_dim=HEAD_DIM)
    cst2 = lambda bi, qi: (0, 0)
    # TODO(synk): segment-aware kv-tile skipping (PrefetchScalarGridSpec over cu_seqlens)
    # would cut work to sum of per-segment s_i^2 for multi-image/video inputs.
    return pl.pallas_call(
        kern,
        out_shape=jax.ShapeDtypeStruct((b, s, e), x.dtype),
        grid=(b, s // tq),
        in_specs=[pl.BlockSpec((1, tq, e), lambda bi, qi: (bi, qi, 0)),   # residual x tile
                  pl.BlockSpec((1, tq, e), lambda bi, qi: (bi, qi, 0)),   # q tile (bf16)
                  pl.BlockSpec((1, s, e), lambda bi, qi: (bi, 0, 0)),     # full K (bf16)
                  pl.BlockSpec((1, s, e), lambda bi, qi: (bi, 0, 0)),     # full V (bf16)
                  pl.BlockSpec((tq, 1), lambda bi, qi: (qi, 0)),          # segment ids (q rows)
                  pl.BlockSpec((1, s), cst2),                             # segment ids (kv cols)
                  pl.BlockSpec((e, e), cst2),                             # out proj weight
                  pl.BlockSpec((1, e), cst2),                             # out proj bias
                  pl.BlockSpec((1, e), cst2),                             # ln2 gamma
                  pl.BlockSpec((1, e), cst2),                             # ln2 beta
                  pl.BlockSpec((e, hdim), cst2),                          # ff1 weight
                  pl.BlockSpec((1, hdim), cst2),                          # ff1 bias
                  pl.BlockSpec((hdim, e), cst2),                          # ff2 weight
                  pl.BlockSpec((1, e), cst2)],                            # ff2 bias
        out_specs=pl.BlockSpec((1, tq, e), lambda bi, qi: (bi, qi, 0)),
        compiler_params=_mosaic_params(("parallel", "parallel")),
    )(x, q, k, v, seg_c, seg_r,
      blk['out_w'], blk['out_b'].reshape(1, e),
      blk['ln2_g'].reshape(1, e), blk['ln2_b'].reshape(1, e),
      blk['ff1_w'], blk['ff1_b'].reshape(1, hdim),
      blk['ff2_w'], blk['ff2_b'].reshape(1, e))


def transformer_block(x, blk, cos, sin, rot, seg_c, seg_r):
    q, k, v = qkv_rope(x, blk, cos, sin, rot)
    return attn_ffn(x, q, k, v, blk, seg_c, seg_r)


# -------------------------------- fused patch merger --------------------------------
def _group_stat_mats():
    """Skinny matrices for per-64-feature-group LN stats: (hid,4) average + (4,hid) expand."""
    hid = EMBED * MERGE * MERGE
    g = MERGE * MERGE
    a = np.zeros((hid, g), np.float32)
    bexp = np.zeros((g, hid), np.float32)
    for gg in range(g):
        a[gg * EMBED:(gg + 1) * EMBED, gg] = 1.0 / EMBED
        bexp[gg, gg * EMBED:(gg + 1) * EMBED] = 1.0
    return jnp.asarray(a), jnp.asarray(bexp)


def _merger_kernel(x_ref, a_ref, e_ref, g_ref, b_ref, w1_ref, b1_ref, w2_ref, b2_ref, o_ref):
    x = x_ref[...].astype(jnp.float32)                    # (tm, 4*EMBED) merged tokens
    # per-64-feature-group LayerNorm stats via skinny matmuls (no in-kernel reshape)
    a = a_ref[...]
    bx = e_ref[...]
    mu = jnp.dot(jnp.dot(x, a, preferred_element_type=jnp.float32), bx,
                 preferred_element_type=jnp.float32)
    ms = jnp.dot(jnp.dot(x * x, a, preferred_element_type=jnp.float32), bx,
                 preferred_element_type=jnp.float32)
    var = jnp.maximum(ms - mu * mu, 0.0)
    y = (x - mu) * jax.lax.rsqrt(var + EPS) * g_ref[...] + b_ref[...]
    h = jnp.dot(y.astype(w1_ref.dtype), w1_ref[...],
                preferred_element_type=jnp.float32) + b1_ref[...]
    # TODO(synk): reference PatchMerger nn.GELU is exact erf GELU; tanh approximation used here.
    h = jax.nn.gelu(h, approximate=True)
    out = jnp.dot(h.astype(w2_ref.dtype), w2_ref[...],
                  preferred_element_type=jnp.float32) + b2_ref[...]
    o_ref[...] = out.astype(o_ref.dtype)


def patch_merger(x4, params):
    m4, hid = x4.shape
    g = MERGE * MERGE
    n = params['m2_w'].shape[1]
    tm = _row_tile(m4)
    a_mat, e_mat = _group_stat_mats()
    g4 = jnp.tile(params['ln_q_g'], g).reshape(1, hid)
    b4 = jnp.tile(params['ln_q_b'], g).reshape(1, hid)
    return pl.pallas_call(
        _merger_kernel,
        out_shape=jax.ShapeDtypeStruct((m4, n), jnp.float32),
        grid=(m4 // tm,),
        in_specs=[pl.BlockSpec((tm, hid), lambda i: (i, 0)),
                  pl.BlockSpec((hid, g), lambda i: (0, 0)),
                  pl.BlockSpec((g, hid), lambda i: (0, 0)),
                  pl.BlockSpec((1, hid), lambda i: (0, 0)),
                  pl.BlockSpec((1, hid), lambda i: (0, 0)),
                  pl.BlockSpec((hid, hid), lambda i: (0, 0)),
                  pl.BlockSpec((1, hid), lambda i: (0, 0)),
                  pl.BlockSpec((hid, n), lambda i: (0, 0)),
                  pl.BlockSpec((1, n), lambda i: (0, 0))],
        out_specs=pl.BlockSpec((tm, n), lambda i: (i, 0)),
        compiler_params=_mosaic_params(("parallel",)),
    )(x4, a_mat, e_mat, g4, b4,
      params['m1_w'], params['m1_b'].reshape(1, hid),
      params['m2_w'], params['m2_b'].reshape(1, n))


# ------------------ host-side static tables (cached once per grid_thw) ------------------
@functools.lru_cache(maxsize=8)
def _static_inputs(grid_thw):
    # segment ids: one segment per temporal frame (matches cu_seqlens block-diag mask)
    seg, sid = [], 0
    for t, h, w in grid_thw:
        for _ in range(t):
            seg.append(np.full((h * w,), sid, np.int32))
            sid += 1
    seg = np.concatenate(seg)
    s_len = seg.shape[0]

    # RotaryEmbedding2D: dim = HEAD_DIM // 2 -> inv_freq length HEAD_DIM // 4
    rot_dim = HEAD_DIM // 2
    inv_freq = 1.0 / (ROPE_THETA ** (np.arange(0, rot_dim, 2, dtype=np.float64) / rot_dim))
    max_hw = int(max(max(h, w) for _, h, w in grid_thw))
    freqs = np.outer(np.arange(max_hw, dtype=np.float64), inv_freq)
    pos_ids = []
    for t, h, w in grid_thw:
        hpos = np.broadcast_to(np.arange(h)[:, None], (h, w))
        hpos = hpos.reshape(h // MERGE, MERGE, w // MERGE, MERGE).transpose(0, 2, 1, 3).reshape(-1)
        wpos = np.broadcast_to(np.arange(w)[None, :], (h, w))
        wpos = wpos.reshape(h // MERGE, MERGE, w // MERGE, MERGE).transpose(0, 2, 1, 3).reshape(-1)
        ids = np.stack([hpos, wpos], axis=-1)
        pos_ids.append(np.tile(ids, (t, 1)))
    pos_ids = np.concatenate(pos_ids, axis=0)
    ang = freqs[pos_ids].reshape(s_len, -1)            # (S, HEAD_DIM//2)  (flatten(1))
    ang = np.concatenate([ang, ang], axis=-1)          # repeat(1,2) -> (S, HEAD_DIM)
    cos = np.tile(np.cos(ang), (1, HEADS)).astype(np.float32)   # (S, EMBED), same per head
    sin = np.tile(np.sin(ang), (1, HEADS)).astype(np.float32)

    # rotate_half as a constant +-1 per-head permutation matrix: rot_half(x) == x @ R
    rot = np.zeros((EMBED, EMBED), np.float32)
    half = HEAD_DIM // 2
    for hh in range(HEADS):
        base = hh * HEAD_DIM
        for j in range(half):
            rot[base + half + j, base + j] = -1.0      # out[j]      = -x[half + j]
            rot[base + j, base + half + j] = 1.0       # out[half+j] =  x[j]

    return (jnp.asarray(cos), jnp.asarray(sin), jnp.asarray(rot),
            jnp.asarray(seg.reshape(s_len, 1)), jnp.asarray(seg.reshape(1, s_len)))


# ------------------------------------- parameters -------------------------------------
def init_params(key):
    wdt = jnp.bfloat16   # MXU-native weight storage; accumulation stays f32 in-kernel

    def dense(k, fan_in, fan_out):
        w = (jax.random.normal(k, (fan_in, fan_out), jnp.float32) * 0.02).astype(wdt)
        return w, jnp.zeros((fan_out,), jnp.float32)

    keys = jax.random.split(key, 2 + NUM_BLOCKS)
    patch_dim = IN_CH * T_PATCH * PATCH * PATCH
    params = {
        # Conv3d(stride == kernel, bias=False) weight stored flattened + transposed
        'patch_w': (jax.random.normal(keys[0], (patch_dim, EMBED), jnp.float32) * 0.02).astype(wdt),
    }
    blocks = []
    for i in range(NUM_BLOCKS):
        bk = jax.random.split(keys[2 + i], 4)
        qkv_w = (jax.random.normal(bk[0], (3, EMBED, EMBED), jnp.float32) * 0.02).astype(wdt)
        qkv_b = jnp.zeros((3, 1, EMBED), jnp.float32)
        out_w, out_b = dense(bk[1], EMBED, EMBED)
        ff1_w, ff1_b = dense(bk[2], EMBED, EMBED * MLP_RATIO)
        ff2_w, ff2_b = dense(bk[3], EMBED * MLP_RATIO, EMBED)
        blocks.append(dict(
            ln1_g=jnp.ones((EMBED,), jnp.float32), ln1_b=jnp.zeros((EMBED,), jnp.float32),
            ln2_g=jnp.ones((EMBED,), jnp.float32), ln2_b=jnp.zeros((EMBED,), jnp.float32),
            qkv_w=qkv_w, qkv_b=qkv_b, out_w=out_w, out_b=out_b,
            ff1_w=ff1_w, ff1_b=ff1_b, ff2_w=ff2_w, ff2_b=ff2_b))
    params['blocks'] = blocks

    hid = EMBED * MERGE * MERGE
    mk = jax.random.split(keys[1], 2)
    params['ln_q_g'] = jnp.ones((EMBED,), jnp.float32)
    params['ln_q_b'] = jnp.zeros((EMBED,), jnp.float32)
    params['m1_w'], params['m1_b'] = dense(mk[0], hid, hid)
    params['m2_w'], params['m2_b'] = dense(mk[1], hid, OUT_SIZE)
    return params


# --------------------------------------- forward ---------------------------------------
def vit_forward(params, hidden_states, grid_thw):
    b, s, p = hidden_states.shape
    grid_key = tuple(tuple(int(v) for v in g) for g in grid_thw)
    cos, sin, rot, seg_c, seg_r = _static_inputs(grid_key)

    # PatchEmbedding3D (Conv3d stride == kernel -> bias-less GEMM)
    x = patch_embed(hidden_states.reshape(-1, p), params['patch_w']).reshape(b, s, EMBED)

    # Transformer blocks: (LN1+QKV+RoPE) kernel + fused (attn+outproj+res+LN2+FFN+res) kernel
    for blk in params['blocks']:
        x = transformer_block(x, blk, cos, sin, rot, seg_c, seg_r)

    # PatchMerger: per-token LN + 2x2 token merge + Linear -> GELU -> Linear
    x4 = x.reshape(-1, EMBED * MERGE * MERGE)
    return patch_merger(x4, params)


if __name__ == "__main__":
    key = jax.random.PRNGKey(0)
    pkey, xkey = jax.random.split(key)
    params = init_params(pkey)

    # two images -> two attention segments (exercises the block-diagonal segment mask)
    grid_thw = ((1, 4, 4), (1, 4, 2))             # 16 + 8 = 24 patch tokens
    S = sum(t * h * w for t, h, w in grid_thw)
    patch_dim = IN_CH * T_PATCH * PATCH * PATCH   # 24
    hidden_states = jax.random.normal(xkey, (1, S, patch_dim), jnp.float32)

    out = vit_forward(params, hidden_states, grid_thw)
    out = jax.block_until_ready(out)
    assert out.shape == (S // (MERGE * MERGE), OUT_SIZE), out.shape
    assert bool(jnp.all(jnp.isfinite(out)))
    print("KERNEL_OK")
</pallas_src>

<mosaic_0001>
module attributes {stable_mosaic.version = 11 : i64} {
  func.func @_patch_embed_kernel(%arg0: i32, %arg1: memref<24x24xf32, #tpu.memory_space<vmem>>, %arg2: memref<24x64xbf16, #tpu.memory_space<vmem>>, %arg3: memref<24x64xf32, #tpu.memory_space<vmem>>) attributes {dimension_semantics = [#tpu.dimension_semantics<parallel>], iteration_bounds = array<i64: 1>, scalar_prefetch = 0 : i64, scratch_operands = 0 : i64, tpu.core_type = #tpu.core_type<tc>, window_params = [{transform_indices = @transform_0, window_bounds = array<i64: 24, 24>}, {pipeline_mode = #tpu.pipeline_mode<synchronous>, transform_indices = @transform_1, window_bounds = array<i64: 24, 64>}, {transform_indices = @transform_2, window_bounds = array<i64: 24, 64>}]} {
    %c0 = arith.constant 0 : index
    %c0_0 = arith.constant 0 : index
    %0 = vector.load %arg1[%c0, %c0_0] : memref<24x24xf32, #tpu.memory_space<vmem>>, vector<24x24xf32>
    %1 = arith.truncf %0 : vector<24x24xf32> to vector<24x24xbf16>
    %c0_1 = arith.constant 0 : index
    %c0_2 = arith.constant 0 : index
    %2 = vector.load %arg2[%c0_1, %c0_2] : memref<24x64xbf16, #tpu.memory_space<vmem>>, vector<24x64xbf16>
    %cst = arith.constant dense<0.000000e+00> : vector<24x64xf32>
    %3 = tpu.matmul %1, %2, %cst {dimension_numbers = #tpu.dot_dimension_numbers<[1], [0], [0], [1], [0, 0, 1, 1], [], []>} : vector<24x24xbf16>, vector<24x64xbf16>, vector<24x64xf32> -> vector<24x64xf32>
    %c0_3 = arith.constant 0 : index
    %c0_4 = arith.constant 0 : index
    %4 = vector.load %arg3[%c0_3, %c0_4] : memref<24x64xf32, #tpu.memory_space<vmem>>, vector<24x64xf32>
    tpu.vector_store %arg3[%c0_3, %c0_4], %3 {strides = array<i32>} : memref<24x64xf32, #tpu.memory_space<vmem>>, vector<24x64xf32>,
    return
  }
  func.func @transform_0(%arg0: i32) -> (i32, i32) {
    %c0_i32 = arith.constant 0 : i32
    %c0_i32_0 = arith.constant 0 : i32
    return %arg0, %c0_i32 : i32, i32
  }
  func.func @transform_1(%arg0: i32) -> (i32, i32) {
    %c0_i32 = arith.constant 0 : i32
    %c0_i32_0 = arith.constant 0 : i32
    %c0_i32_1 = arith.constant 0 : i32
    return %c0_i32, %c0_i32_0 : i32, i32
  }
  func.func @transform_2(%arg0: i32) -> (i32, i32) {
    %c0_i32 = arith.constant 0 : i32
    %c0_i32_0 = arith.constant 0 : i32
    return %arg0, %c0_i32 : i32, i32
  }
}

</mosaic_0001>

<llo_original>
// kernel: tpu_custom_call.1
$region0: #{tpu_custom_call.1}
  #allocation0 [shape = 'u32[]', space=smem, size = 0x4, offset = 0x4, fixed_abs, tag = 'smem constant byte address 0x4 - core index']
  #allocation1 [shape = 'u32[144,128]{1,0:T(1,128)}', space=vmem, size = 0x12000, scoped, tag = 'internal scratch']
  %s0 = inlined_call_operand.hbm [shape: f32[24,24], index: 0, kind: input, shape index: {}]
  %s1 = inlined_call_operand.hbm [shape: bf16[24,64], index: 1, kind: input, shape index: {}]
  %s2 = inlined_call_operand.hbm [shape: f32[24,64], index: 2, kind: output, shape index: {}]
  %s3 = sld [smem:[#allocation0]]
  $region26: #{tpu_custom_call.1} parent=0
    _
  %s5 = ssub.s32 1, %s3
  %s6 = scalar_select 0, %s5, %s3
  $region1: #{tpu_custom_call.1} parent=0
    #allocation2 [shape = 'u8[12288]{0}', space=vmem, size = 0x3000, scoped, tag = 'input window, operand 0, single buffered']
    #allocation3 [shape = 's32[1]{0}', space=sflag, size = 0x4, scoped, tag = 'scoped memory for tpu_custom_call.1']
    #allocation4 [shape = 's32[1]{0}', space=sflag, size = 0x4, scoped, tag = 'scoped memory for tpu_custom_call.1']
    #allocation5 [shape = 'u8[6144]{0}', space=vmem, size = 0x1800, scoped, tag = 'input window, operand 1, single buffered']
    #allocation6 [shape = 's32[1]{0}', space=sflag, size = 0x4, scoped, tag = 'scoped memory for tpu_custom_call.1']
    #allocation7 [shape = 'u8[12288]{0}', space=vmem, size = 0x3000, scoped, tag = 'output window, operand 0, single buffered']
    %7 = vsyncpa [#allocation3], 0
    %8 = vsyncpa [#allocation6], 0
    %9 = vsyncpa [#allocation4], 0
    // Predicated region
    $region2: #{tpu_custom_call.1} parent=1 // pred_check
      _
    $region3: #{tpu_custom_call.1} parent=1 // pred_check_branch
      %11 = sbr.rel (0) target = $region5
    $region4: #{tpu_custom_call.1} parent=1 // pred_region
      %s13 = ssub.s32 384, 384
      %14 = vsyncadd [#allocation3], %s13
      %s15 = sshll.u32 [#allocation2], 4
      %s16 = int_to_ptr.vmem [resolvable:$true] %s15
      %21 = dma.hbm_to_vmem [thread:$0]  %s0, 384, %s16, [#allocation3], 128, 128, 8
    $region5: #{tpu_custom_call.1} parent=1 // pred_fallthru
      _
    // Predicated region
    $region6: #{tpu_custom_call.1} parent=1 // pred_check
      _
    $region7: #{tpu_custom_call.1} parent=1 // pred_check_branch
      %23 = sbr.rel (0) target = $region9
    $region8: #{tpu_custom_call.1} parent=1 // pred_region
      %s25 = ssub.s32 192, 192
      %26 = vsyncadd [#allocation6], %s25
      %s27 = sshll.u32 [#allocation5], 4
      %s28 = int_to_ptr.vmem [resolvable:$true] %s27
      %33 = dma.hbm_to_vmem [thread:$0]  %s1, 192, %s28, [#allocation6], 64, 64, 4
    $region9: #{tpu_custom_call.1} parent=1 // pred_fallthru
      _
    // Predicated region
    $region10: #{tpu_custom_call.1} parent=1 // pred_check
      _
    $region11: #{tpu_custom_call.1} parent=1 // pred_check_branch
      %35 = sbr.rel (0) target = $region13
    $region12: #{tpu_custom_call.1} parent=1 // pred_region
      %36 = dma.done [#allocation3], 384
    $region13: #{tpu_custom_call.1} parent=1 // pred_fallthru
      _
    // Predicated region
    $region14: #{tpu_custom_call.1} parent=1 // pred_check
      _
    $region15: #{tpu_custom_call.1} parent=1 // pred_check_branch
      %38 = sbr.rel (0) target = $region17
    $region16: #{tpu_custom_call.1} parent=1 // pred_region
      %39 = dma.done [#allocation6], 192
    $region17: #{tpu_custom_call.1} parent=1 // pred_fallthru
      _
    %v41 = vld [vmem:[#allocation2] sm:$0xff]
    %v42 = vld [vmem:[#allocation2 + $0x8] sm:$0xff]
    %v43 = vld [vmem:[#allocation2 + $0x10] sm:$0xff]
    %v44 = vpack.c.bf16 %v42, %v41
    %v45 = vpack.c.bf16 %v43, %v43
    %v46 = vld [vmem:[#allocation5] sm:$0xf]
    %v47 = vld [vmem:[#allocation5 + $0x4] sm:$0xf]
    %v48 = vld [vmem:[#allocation5 + $0x8] sm:$0xf]
    %v52 = vunpack.c.l.b16 %v46
    %v53 = vunpack.c.l.b16 %v47
    %v54 = vunpack.c.l.b16 %v48
    %v55 = vpack.c.b16 %v53, %v52
    %v56 = vpack.c.b16 %v54, %v54
    %vm58 = vcmask 195584
    %v60 = vsel %vm58, %v44, 0
    %v63 = vsel %vm58, %v45, 0
    %vm65 = vcmask 1043456
    %v67 = vsel %vm65, %v56, 0
    %69 = vmatprep.subr.bf16.mxu0 0
    %70 = vmatpush1.bf16.msra.mxu0 %v55
    %71 = vmatprep.subr.bf16.mxu0 0
    %72 = vmatpush1.bf16.msra.mxu0 %v67
    %73 = vmatprep.subr.bf16.mxu0 0
    %74 = vmatpush1.bf16.msra.mxu0 0
    %75 = vmatprep.subr.bf16.mxu0 0
    %76 = vmatpush1.bf16.msra.mxu0 0
    %77 = vmatprep.subr.bf16.mxu0 0
    %78 = vmatpush1.bf16.msra.mxu0 0
    %79 = vmatprep.subr.bf16.mxu0 0
    %80 = vmatpush1.bf16.msra.mxu0 0
    %81 = vmatprep.subr.bf16.mxu0 0
    %82 = vmatpush1.bf16.msra.mxu0 0
    %83 = vmatprep.subr.bf16.mxu0 0
    %84 = vmatpush1.bf16.msra.mxu0 0
    %85 = vmatprep.subr.bf16.mxu0 0
    %86 = vmatpush1.bf16.msra.mxu0 0
    %87 = vmatprep.subr.bf16.mxu0 0
    %88 = vmatpush1.bf16.msra.mxu0 0
    %89 = vmatprep.subr.bf16.mxu0 0
    %90 = vmatpush1.bf16.msra.mxu0 0
    %91 = vmatprep.subr.bf16.mxu0 0
    %92 = vmatpush1.bf16.msra.mxu0 0
    %93 = vmatprep.subr.bf16.mxu0 0
    %94 = vmatpush1.bf16.msra.mxu0 0
    %95 = vmatprep.subr.bf16.mxu0 0
    %96 = vmatpush1.bf16.msra.mxu0 0
    %97 = vmatprep.subr.bf16.mxu0 0
    %98 = vmatpush1.bf16.msra.mxu0 0
    %99 = vmatprep.subr.bf16.mxu0 0
    %100 = vmatpush1.bf16.msra.mxu0 0
    %101 = vmatprep.mubr.bf16.mxu0 0
    %102 = vmatmul.mubr.bf16.gmra.mrb[0].mxu0 %v60
    %v103 = vpop.f32.mrb[0].mxu0
    %v104 = vadd.f32 0.0, %v103
    %v105 = vpop.f32.mrb[0].mxu0
    %v106 = vpop.f32.mrb[0].mxu0
    %v107 = vadd.f32 0.0, %v106
    %v108 = vpop.f32.mrb[0].mxu0
    %109 = vmatprep.mubr.bf16.mxu0 0
    %110 = vmatmul.mubr.bf16.gmra.mrb[0].mxu0 %v63
    %v111 = vpop.f32.mrb[0].mxu0
    %v112 = vadd.f32 0.0, %v111
    %v113 = vpop.f32.mrb[0].mxu0
    %v114 = vpop.f32.mrb[0].mxu0
    %v115 = vpop.f32.mrb[0].mxu0
    %116 = vdwg.mxu0
    %vm117 = vcmask 523264
    %118 = vst.msk [vmem:[#allocation7] sm:$0xff] %vm117, %v104
    %119 = vst.msk [vmem:[#allocation7 + $0x8] sm:$0xff] %vm117, %v107
    %120 = vst.msk [vmem:[#allocation7 + $0x10] sm:$0xff] %vm117, %v112
    // Predicated region
    $region18: #{tpu_custom_call.1} parent=1 // pred_check
      _
    $region19: #{tpu_custom_call.1} parent=1 // pred_check_branch
      %122 = sbr.rel (0) target = $region21
    $region20: #{tpu_custom_call.1} parent=1 // pred_region
      %s124 = ssub.s32 384, 384
      %125 = vsyncadd [#allocation4], %s124
      %s126 = sshll.u32 [#allocation7], 4
      %s127 = int_to_ptr.vmem [resolvable:$true] %s126
      %132 = dma.vmem_to_hbm [thread:$0]  %s127, 384, %s2, [#allocation4], 128, 128, 8
    $region21: #{tpu_custom_call.1} parent=1 // pred_fallthru
      _
    // Predicated region
    $region22: #{tpu_custom_call.1} parent=1 // pred_check
      _
    $region23: #{tpu_custom_call.1} parent=1 // pred_check_branch
      %134 = sbr.rel (0) target = $region25
    $region24: #{tpu_custom_call.1} parent=1 // pred_region
      %135 = dma.done [#allocation4], 384
    $region25: #{tpu_custom_call.1} parent=1 // pred_fallthru
      _
    %136 = vsyncpa [#allocation3], 1
    %137 = vsyncpa [#allocation6], 1
    %138 = vsyncpa [#allocation4], 1

</llo_original>
